<compile_context>
chip_gen: v6e
topology: v6e:2x2x1
jax: 0.10.0
libtpu: 0.0.40
codegen_flags: <defaults>
</compile_context>

<pallas_src>
import functools

import jax
import jax.numpy as jnp
import numpy as np
from jax.experimental import pallas as pl
from jax.experimental.pallas import tpu as pltpu

BIT_WIDTH = 8
QMAX = 2 ** (BIT_WIDTH - 1) - 1          # 127
QMIN = -(2 ** (BIT_WIDTH - 1))           # -128


def _round_up(x, m):
    return ((x + m - 1) // m) * m


# ---------------------------------------------------------------------------
# Pallas kernels
# ---------------------------------------------------------------------------
def _w8a8_linear_kernel(inv_sx_ref, x_ref, wt_ref, b_ref, s_ref, o_ref):
    """Hot path.
       x_int = clip(round(x * (1/s_x)), -128, 127)
       o    += x_int @ W^T            (bf16 MXU, fp32 accumulation -> exact for int8 ops)
       out   = (o + round(B_INT8/s_x)) * (S_W * s_x)   (epilogue, per output channel)
    """
    k = pl.program_id(2)

    @pl.when(k == 0)
    def _():
        o_ref[...] = jnp.zeros_like(o_ref)

    inv_sx = inv_sx_ref[0, 0]
    # activation quantization (round_ste forward); int8 values are exact in bf16
    x_int = jnp.clip(jnp.round(x_ref[...] * inv_sx), QMIN, QMAX)
    o_ref[...] += jnp.dot(
        x_int.astype(jnp.bfloat16),
        wt_ref[...].astype(jnp.bfloat16),
        preferred_element_type=jnp.float32,
    )

    @pl.when(k == pl.num_programs(2) - 1)
    def _():
        # b_ref already holds round(B_INT8/s_x); s_ref holds S_W*s_x (both hoisted).
        o_ref[...] = (o_ref[...] + b_ref[...]) * s_ref[...]


def _fp_scaled_linear_kernel(x_ref, wt_ref, s_ref, b_ref, o_ref):
    """out = (x @ W^T) * scale + bias   (fp32 accumulation).
       Covers the s_x==0 branch (W^T = int8 weight, scale = S_W, bias = B_FP32)
       and the no-quant branch (W^T = fp32 weight, scale = 1, bias = B_FP32)."""
    k = pl.program_id(2)

    @pl.when(k == 0)
    def _():
        o_ref[...] = jnp.zeros_like(o_ref)

    o_ref[...] += jnp.dot(
        x_ref[...],
        wt_ref[...].astype(jnp.float32),
        preferred_element_type=jnp.float32,
    )

    @pl.when(k == pl.num_programs(2) - 1)
    def _():
        o_ref[...] = o_ref[...] * s_ref[...] + b_ref[...]


# ---------------------------------------------------------------------------
# Wrappers around pallas_call
# ---------------------------------------------------------------------------
def _pick_tm(M):
    return min(256, _round_up(M, 8))


@functools.partial(jax.jit, static_argnames=("n_out", "TK", "TN"))
def pallas_w8a8_linear(x2d, wt_pad_int8, b_int8_row, s_w_row, s_x, *, n_out, TK, TN):
    M, K = x2d.shape
    Kp, Np = wt_pad_int8.shape
    TM = _pick_tm(M)
    Mp = _round_up(M, TM)
    x_pad = jnp.pad(x2d, ((0, Mp - M), (0, Kp - K)))

    s_x = jnp.asarray(s_x, jnp.float32)
    inv_sx = (1.0 / s_x).reshape(1, 1)                 # multiply instead of per-elem divide
    b_int32_row = jnp.round(b_int8_row / s_x)          # hoisted epilogue bias
    s_a_row = s_w_row * s_x                            # hoisted per-channel rescale

    grid = (Mp // TM, Np // TN, Kp // TK)
    out = pl.pallas_call(
        _w8a8_linear_kernel,
        out_shape=jax.ShapeDtypeStruct((Mp, Np), jnp.float32),
        grid_spec=pltpu.PrefetchScalarGridSpec(
            num_scalar_prefetch=0,
            grid=grid,
            in_specs=[
                pl.BlockSpec(memory_space=pltpu.MemorySpace.SMEM),   # 1/s_x scalar
                pl.BlockSpec((TM, TK), lambda i, j, k: (i, k)),      # x
                pl.BlockSpec((TK, TN), lambda i, j, k: (k, j)),      # W^T (int8, pre-transposed)
                pl.BlockSpec((1, TN), lambda i, j, k: (0, j)),       # round(B_INT8/s_x)
                pl.BlockSpec((1, TN), lambda i, j, k: (0, j)),       # S_W*s_x
            ],
            out_specs=pl.BlockSpec((TM, TN), lambda i, j, k: (i, j)),
        ),
        compiler_params=pltpu.CompilerParams(
            dimension_semantics=("parallel", "parallel", "arbitrary")
        ),
    )(inv_sx, x_pad, wt_pad_int8, b_int32_row, s_a_row)
    return out[:M, :n_out]


@functools.partial(jax.jit, static_argnames=("n_out", "TK", "TN"))
def pallas_fp_scaled_linear(x2d, wt_pad, s_row, b_row, *, n_out, TK, TN):
    M, K = x2d.shape
    Kp, Np = wt_pad.shape
    TM = _pick_tm(M)
    Mp = _round_up(M, TM)
    x_pad = jnp.pad(x2d, ((0, Mp - M), (0, Kp - K)))

    grid = (Mp // TM, Np // TN, Kp // TK)
    out = pl.pallas_call(
        _fp_scaled_linear_kernel,
        out_shape=jax.ShapeDtypeStruct((Mp, Np), jnp.float32),
        grid_spec=pltpu.PrefetchScalarGridSpec(
            num_scalar_prefetch=0,
            grid=grid,
            in_specs=[
                pl.BlockSpec((TM, TK), lambda i, j, k: (i, k)),      # x
                pl.BlockSpec((TK, TN), lambda i, j, k: (k, j)),      # W^T
                pl.BlockSpec((1, TN), lambda i, j, k: (0, j)),       # per-channel scale
                pl.BlockSpec((1, TN), lambda i, j, k: (0, j)),       # bias
            ],
            out_specs=pl.BlockSpec((TM, TN), lambda i, j, k: (i, j)),
        ),
        compiler_params=pltpu.CompilerParams(
            dimension_semantics=("parallel", "parallel", "arbitrary")
        ),
    )(x_pad, wt_pad, s_row, b_row)
    return out[:M, :n_out]


# ---------------------------------------------------------------------------
# Module equivalent
# ---------------------------------------------------------------------------
class QuantLinearWithWeight:
    """JAX/Pallas re-implementation of QuantLinearWithWeight for nn.Linear."""

    def __init__(self, w_fp32, b_fp32, *, tk=512, tn=256):
        self.W_FP32 = jnp.asarray(w_fp32, jnp.float32)            # (N, K)
        self.B_FP32 = jnp.asarray(b_fp32, jnp.float32)            # (N,)
        N, K = self.W_FP32.shape
        self.N, self.K = N, K

        # AbsMax per-channel weight quantization (channel = output feature).
        s_w = jnp.max(jnp.abs(self.W_FP32), axis=1) / QMAX        # (N,)
        self.S_W = s_w
        w_int8 = jnp.clip(jnp.round(self.W_FP32 / s_w[:, None]), QMIN, QMAX)
        self.W_INT8 = w_int8.astype(jnp.int8)                     # real int8 storage
        self.B_INT8 = jnp.round(self.B_FP32 / s_w)                # kept fp32 (range > int8)

        # Tile sizes (K/N fixed per module); K-tile >= 128 and raised to 512 when possible.
        self.TK = min(tk, _round_up(K, 128))
        self.TN = min(tn, _round_up(N, 128))
        Kp = _round_up(K, self.TK)
        Np = _round_up(N, self.TN)

        # Pre-transposed, zero-padded weights: (K, N) layout feeds the MXU directly,
        # removes the per-step in-kernel transpose and makes the output lane-dense.
        self.W_INT8_T_PAD = jnp.pad(self.W_INT8.T, ((0, Kp - K), (0, Np - N)))
        self.W_FP32_T_PAD = jnp.pad(self.W_FP32.T, ((0, Kp - K), (0, Np - N)))
        self.B_FP32_ROW = jnp.pad(self.B_FP32, (0, Np - N)).reshape(1, Np)
        self.B_INT8_ROW = jnp.pad(self.B_INT8, (0, Np - N)).reshape(1, Np)
        self.S_W_ROW = jnp.pad(self.S_W, (0, Np - N)).reshape(1, Np)
        self.ONES_ROW = jnp.ones((1, Np), jnp.float32)

        self.do_quant = True
        # TODO(synk): AdaRound branch (self._v / _h soft rounding) not implemented;
        # forward below uses the plain W_INT8 path as in adaround_scheme=False.

    def forward(self, x_hat, s_x):
        B, S, K = x_hat.shape
        x2d = x_hat.reshape(B * S, K).astype(jnp.float32)

        if self.do_quant and isinstance(s_x, (int, float)) and s_x == 0:
            # Weight-quant only (W8A32): (x @ W_INT8^T) * S_W + B_FP32
            # (int8 weight streamed directly; per-channel scale applied in the epilogue)
            out = pallas_fp_scaled_linear(
                x2d, self.W_INT8_T_PAD, self.S_W_ROW, self.B_FP32_ROW,
                n_out=self.N, TK=self.TK, TN=self.TN)
            return out.reshape(B, S, self.N), s_x
        elif self.do_quant:
            # W8A8 integer GEMM path (hot path, fully in Pallas)
            s_x_f = jnp.asarray(s_x, jnp.float32)
            out = pallas_w8a8_linear(
                x2d, self.W_INT8_T_PAD, self.B_INT8_ROW, self.S_W_ROW, s_x_f,
                n_out=self.N, TK=self.TK, TN=self.TN)
            s_a = (self.S_W * s_x_f).reshape(1, self.N)
            return out.reshape(B, S, self.N), s_a                 # act_quant = identity
        else:
            out = pallas_fp_scaled_linear(
                x2d, self.W_FP32_T_PAD, self.ONES_ROW, self.B_FP32_ROW,
                n_out=self.N, TK=self.TK, TN=self.TN)
            return out.reshape(B, S, self.N), s_x


# ---------------------------------------------------------------------------
# Reference (plain JAX) for verification
# ---------------------------------------------------------------------------
def reference_w8a8(x, w_int8, b_int8, s_w, s_x):
    B, S, K = x.shape
    x2d = x.reshape(B * S, K).astype(jnp.float32)
    x_int = jnp.round(x2d / s_x)
    b_int32 = jnp.round(b_int8 / s_x)
    a_int32 = x_int @ w_int8.astype(jnp.float32).T + b_int32[None, :]
    a_hat = a_int32 * (s_w * s_x)[None, :]
    return a_hat.reshape(B, S, -1)


def reference_wq_only(x, w_int8, s_w, b_fp32):
    B, S, K = x.shape
    x2d = x.reshape(B * S, K).astype(jnp.float32)
    w_dq = w_int8.astype(jnp.float32) * s_w[:, None]
    out = x2d @ w_dq.T + b_fp32[None, :]
    return out.reshape(B, S, -1)


if __name__ == "__main__":
    # Small shapes consistent with an nn.Linear inside a transformer block.
    B, S, K, N = 2, 8, 256, 128
    key = jax.random.PRNGKey(0)
    kw, kb, kx = jax.random.split(key, 3)

    W = jax.random.normal(kw, (N, K), jnp.float32) * 0.05
    Bias = jax.random.normal(kb, (N,), jnp.float32) * 0.1
    x = jax.random.normal(kx, (B, S, K), jnp.float32)

    mod = QuantLinearWithWeight(W, Bias)

    # Activation scale: abs-max / 127 so that x_int lies in [-127, 127].
    s_x = float(jnp.max(jnp.abs(x)) / QMAX)

    # ---- W8A8 hot path ----
    out, s_a = mod.forward(x, s_x)
    out = jax.block_until_ready(out)
    ref = reference_w8a8(x, mod.W_INT8, mod.B_INT8, mod.S_W, s_x)
    np.testing.assert_allclose(np.asarray(out), np.asarray(ref), rtol=5e-4, atol=1e-2)

    # ---- W8A32 (weight-quant only) branch ----
    out_wq, _ = mod.forward(x, 0)
    out_wq = jax.block_until_ready(out_wq)
    ref_wq = reference_wq_only(x, mod.W_INT8, mod.S_W, mod.B_FP32)
    np.testing.assert_allclose(np.asarray(out_wq), np.asarray(ref_wq), rtol=1e-4, atol=1e-3)

    # ---- no-quant branch ----
    mod.do_quant = False
    out_fp, _ = mod.forward(x, 0.0)
    jax.block_until_ready(out_fp)

    print("KERNEL_OK")
</pallas_src>

<mosaic_0001>
module attributes {stable_mosaic.version = 11 : i64} {
  func.func @_w8a8_linear_kernel(%arg0: i32, %arg1: i32, %arg2: i32, %arg3: memref<1x1xf32, #tpu.memory_space<smem>>, %arg4: memref<16x256xf32, #tpu.memory_space<vmem>>, %arg5: memref<256x128xi8, #tpu.memory_space<vmem>>, %arg6: memref<1x128xf32, #tpu.memory_space<vmem>>, %arg7: memref<1x128xf32, #tpu.memory_space<vmem>>, %arg8: memref<16x128xf32, #tpu.memory_space<vmem>>) attributes {dimension_semantics = [#tpu.dimension_semantics<parallel>, #tpu.dimension_semantics<parallel>, #tpu.dimension_semantics<arbitrary>], iteration_bounds = array<i64: 1, 1, 1>, scalar_prefetch = 0 : i64, scratch_operands = 0 : i64, tpu.core_type = #tpu.core_type<tc>, window_params = [{transform_indices = @transform_0, window_bounds = array<i64: 1, 1>}, {transform_indices = @transform_1, window_bounds = array<i64: 16, 256>}, {transform_indices = @transform_2, window_bounds = array<i64: 256, 128>}, {transform_indices = @transform_3, window_bounds = array<i64: 1, 128>}, {transform_indices = @transform_4, window_bounds = array<i64: 1, 128>}, {transform_indices = @transform_5, window_bounds = array<i64: 16, 128>}]} {
    %c0_i32 = arith.constant 0 : i32
    %0 = arith.cmpi eq, %arg2, %c0_i32 : i32
    %1 = arith.extui %0 : i1 to i32
    %c0_i32_0 = arith.constant 0 : i32
    %2 = arith.cmpi ne, %1, %c0_i32_0 : i32
    scf.if %2 {
      %cst_12 = arith.constant 0.000000e+00 : f32
      %24 = vector.broadcast %cst_12 : f32 to vector<16x128xf32>
      %c0_13 = arith.constant 0 : index
      %c0_14 = arith.constant 0 : index
      %25 = vector.load %arg8[%c0_13, %c0_14] : memref<16x128xf32, #tpu.memory_space<vmem>>, vector<16x128xf32>
      tpu.vector_store %arg8[%c0_13, %c0_14], %24 {strides = array<i32>} : memref<16x128xf32, #tpu.memory_space<vmem>>, vector<16x128xf32>,
    } else {
    }
    %c0 = arith.constant 0 : index
    %c0_1 = arith.constant 0 : index
    %3 = memref.load %arg3[%c0, %c0_1] : memref<1x1xf32, #tpu.memory_space<smem>>
    %c0_2 = arith.constant 0 : index
    %c0_3 = arith.constant 0 : index
    %4 = vector.load %arg4[%c0_2, %c0_3] : memref<16x256xf32, #tpu.memory_space<vmem>>, vector<16x256xf32>
    %5 = vector.broadcast %3 : f32 to vector<16x256xf32>
    %6 = arith.mulf %4, %5 : vector<16x256xf32>
    %7 = math.roundeven %6 : vector<16x256xf32>
    %c-128_i32 = arith.constant -128 : i32
    %c127_i32 = arith.constant 127 : i32
    %8 = arith.sitofp %c-128_i32 : i32 to f32
    %9 = vector.broadcast %8 : f32 to vector<16x256xf32>
    %10 = arith.maximumf %9, %7 : vector<16x256xf32>
    %11 = arith.sitofp %c127_i32 : i32 to f32
    %12 = vector.broadcast %11 : f32 to vector<16x256xf32>
    %13 = arith.minimumf %12, %10 : vector<16x256xf32>
    %c0_4 = arith.constant 0 : index
    %c0_5 = arith.constant 0 : index
    %14 = vector.load %arg8[%c0_4, %c0_5] : memref<16x128xf32, #tpu.memory_space<vmem>>, vector<16x128xf32>
    %15 = arith.truncf %13 : vector<16x256xf32> to vector<16x256xbf16>
    %c0_6 = arith.constant 0 : index
    %c0_7 = arith.constant 0 : index
    %16 = vector.load %arg5[%c0_6, %c0_7] : memref<256x128xi8, #tpu.memory_space<vmem>>, vector<256x128xi8>
    %17 = arith.sitofp %16 : vector<256x128xi8> to vector<256x128xbf16>
    %cst = arith.constant dense<0.000000e+00> : vector<16x128xf32>
    %18 = tpu.matmul %15, %17, %cst {dimension_numbers = #tpu.dot_dimension_numbers<[1], [0], [0], [1], [0, 0, 1, 1], [], []>} : vector<16x256xbf16>, vector<256x128xbf16>, vector<16x128xf32> -> vector<16x128xf32>
    %19 = arith.addf %14, %18 : vector<16x128xf32>
    %c0_8 = arith.constant 0 : index
    %c0_9 = arith.constant 0 : index
    %20 = vector.load %arg8[%c0_8, %c0_9] : memref<16x128xf32, #tpu.memory_space<vmem>>, vector<16x128xf32>
    tpu.vector_store %arg8[%c0_8, %c0_9], %19 {strides = array<i32>} : memref<16x128xf32, #tpu.memory_space<vmem>>, vector<16x128xf32>,
    %c0_i32_10 = arith.constant 0 : i32
    %21 = arith.cmpi eq, %arg2, %c0_i32_10 : i32
    %22 = arith.extui %21 : i1 to i32
    %c0_i32_11 = arith.constant 0 : i32
    %23 = arith.cmpi ne, %22, %c0_i32_11 : i32
    scf.if %23 {
      %c0_12 = arith.constant 0 : index
      %c0_13 = arith.constant 0 : index
      %24 = vector.load %arg8[%c0_12, %c0_13] : memref<16x128xf32, #tpu.memory_space<vmem>>, vector<16x128xf32>
      %c0_14 = arith.constant 0 : index
      %c0_15 = arith.constant 0 : index
      %25 = vector.load %arg6[%c0_14, %c0_15] : memref<1x128xf32, #tpu.memory_space<vmem>>, vector<1x128xf32>
      %26 = vector.broadcast %25 : vector<1x128xf32> to vector<16x128xf32>
      %27 = arith.addf %24, %26 : vector<16x128xf32>
      %c0_16 = arith.constant 0 : index
      %c0_17 = arith.constant 0 : index
      %28 = vector.load %arg7[%c0_16, %c0_17] : memref<1x128xf32, #tpu.memory_space<vmem>>, vector<1x128xf32>
      %29 = vector.broadcast %28 : vector<1x128xf32> to vector<16x128xf32>
      %30 = arith.mulf %27, %29 : vector<16x128xf32>
      %c0_18 = arith.constant 0 : index
      %c0_19 = arith.constant 0 : index
      %31 = vector.load %arg8[%c0_18, %c0_19] : memref<16x128xf32, #tpu.memory_space<vmem>>, vector<16x128xf32>
      tpu.vector_store %arg8[%c0_18, %c0_19], %30 {strides = array<i32>} : memref<16x128xf32, #tpu.memory_space<vmem>>, vector<16x128xf32>,
    } else {
    }
    return
  }
  func.func @transform_0(%arg0: i32, %arg1: i32, %arg2: i32) -> (i32, i32) {
    %c0_i32 = arith.constant 0 : i32
    %c0_i32_0 = arith.constant 0 : i32
    %c0_i32_1 = arith.constant 0 : i32
    return %c0_i32, %c0_i32_0 : i32, i32
  }
  func.func @transform_1(%arg0: i32, %arg1: i32, %arg2: i32) -> (i32, i32) {
    %c0_i32 = arith.constant 0 : i32
    return %arg0, %arg2 : i32, i32
  }
  func.func @transform_2(%arg0: i32, %arg1: i32, %arg2: i32) -> (i32, i32) {
    %c0_i32 = arith.constant 0 : i32
    return %arg2, %arg1 : i32, i32
  }
  func.func @transform_3(%arg0: i32, %arg1: i32, %arg2: i32) -> (i32, i32) {
    %c0_i32 = arith.constant 0 : i32
    %c0_i32_0 = arith.constant 0 : i32
    return %c0_i32, %arg1 : i32, i32
  }
  func.func @transform_4(%arg0: i32, %arg1: i32, %arg2: i32) -> (i32, i32) {
    %c0_i32 = arith.constant 0 : i32
    %c0_i32_0 = arith.constant 0 : i32
    return %c0_i32, %arg1 : i32, i32
  }
  func.func @transform_5(%arg0: i32, %arg1: i32, %arg2: i32) -> (i32, i32) {
    %c0_i32 = arith.constant 0 : i32
    return %arg0, %arg1 : i32, i32
  }
}

</mosaic_0001>

<llo_original>
// kernel: pallas_w8a8_linear.1
$region0: #{pallas_w8a8_linear.1}
  #allocation0 [shape = 'u32[]', space=smem, size = 0x4, offset = 0x4, fixed_abs, tag = 'smem constant byte address 0x4 - core index']
  #allocation1 [shape = 'u32[144,128]{1,0:T(1,128)}', space=vmem, size = 0x12000, scoped, tag = 'internal scratch']
  #allocation2 [shape = 'f32[1,1]{1,0:T(1,128)S(6)}', space=smem, size = 0x200, scoped, tag = 'scoped memory for pallas_w8a8_linear.1']
  %s0 = inlined_call_operand.<no memory space> [shape: f32[1,1], index: 0, kind: input, shape index: {}]
  %s1 = inlined_call_operand.hbm [shape: f32[16,256], index: 1, kind: input, shape index: {}]
  %s2 = inlined_call_operand.hbm [shape: s8[256,128], index: 2, kind: input, shape index: {}]
  %s3 = inlined_call_operand.vmem [shape: f32[1,128], index: 3, kind: input, shape index: {}]
  %s4 = inlined_call_operand.vmem [shape: f32[1,128], index: 4, kind: input, shape index: {}]
  %s5 = inlined_call_operand.hbm [shape: f32[16,128], index: 5, kind: output, shape index: {}]
  %s6 = sld [smem:[#allocation0]]
  $region46: #{pallas_w8a8_linear.1} parent=0
    _
  %s8 = ssub.s32 1, %s6
  %s9 = scalar_select 0, %s8, %s6
  %10 = sst [smem:[#allocation2]] %s0
  $region1: #{pallas_w8a8_linear.1} parent=0
    #allocation3 [shape = 'u8[16384]{0}', space=vmem, size = 0x4000, scoped, tag = 'input window, operand 1, single buffered']
    #allocation4 [shape = 's32[1]{0}', space=sflag, size = 0x4, scoped, tag = 'scoped memory for pallas_w8a8_linear.1']
    #allocation5 [shape = 's32[1]{0}', space=sflag, size = 0x4, scoped, tag = 'scoped memory for pallas_w8a8_linear.1']
    #allocation6 [shape = 'u8[32768]{0}', space=vmem, size = 0x8000, scoped, tag = 'input window, operand 2, single buffered']
    #allocation7 [shape = 's32[1]{0}', space=sflag, size = 0x4, scoped, tag = 'scoped memory for pallas_w8a8_linear.1']
    #allocation8 [shape = 'u8[8192]{0}', space=vmem, size = 0x2000, scoped, tag = 'output window, operand 0, single buffered']
    %11 = vsyncpa [#allocation4], 0
    %12 = vsyncpa [#allocation7], 0
    %13 = vsyncpa [#allocation5], 0
    // Predicated region
    $region2: #{pallas_w8a8_linear.1} parent=1 // pred_check
      _
    $region3: #{pallas_w8a8_linear.1} parent=1 // pred_check_branch
      %15 = sbr.rel (0) target = $region5
    $region4: #{pallas_w8a8_linear.1} parent=1 // pred_region
      _
    $region5: #{pallas_w8a8_linear.1} parent=1 // pred_fallthru
      _
    // Predicated region
    $region6: #{pallas_w8a8_linear.1} parent=1 // pred_check
      _
    $region7: #{pallas_w8a8_linear.1} parent=1 // pred_check_branch
      %17 = sbr.rel (0) target = $region9
    $region8: #{pallas_w8a8_linear.1} parent=1 // pred_region
      %s19 = ssub.s32 512, 512
      %20 = vsyncadd [#allocation4], %s19
      %s21 = sshll.u32 [#allocation3], 4
      %s22 = int_to_ptr.vmem [resolvable:$true] %s21
      %27 = dma.hbm_to_vmem [thread:$0]  %s1, 512, %s22, [#allocation4], 256, 256, 16
    $region9: #{pallas_w8a8_linear.1} parent=1 // pred_fallthru
      _
    // Predicated region
    $region10: #{pallas_w8a8_linear.1} parent=1 // pred_check
      _
    $region11: #{pallas_w8a8_linear.1} parent=1 // pred_check_branch
      %29 = sbr.rel (0) target = $region13
    $region12: #{pallas_w8a8_linear.1} parent=1 // pred_region
      %s31 = ssub.s32 1024, 1024
      %32 = vsyncadd [#allocation7], %s31
      %s33 = sshll.u32 [#allocation6], 4
      %s34 = int_to_ptr.vmem [resolvable:$true] %s33
      %39 = dma.hbm_to_vmem [thread:$0]  %s2, 1024, %s34, [#allocation7], 128, 128, 8
    $region13: #{pallas_w8a8_linear.1} parent=1 // pred_fallthru
      _
    // Predicated region
    $region14: #{pallas_w8a8_linear.1} parent=1 // pred_check
      _
    $region15: #{pallas_w8a8_linear.1} parent=1 // pred_check_branch
      %41 = sbr.rel (0) target = $region17
    $region16: #{pallas_w8a8_linear.1} parent=1 // pred_region
      _
    $region17: #{pallas_w8a8_linear.1} parent=1 // pred_fallthru
      _
    // Predicated region
    $region18: #{pallas_w8a8_linear.1} parent=1 // pred_check
      _
    $region19: #{pallas_w8a8_linear.1} parent=1 // pred_check_branch
      %43 = sbr.rel (0) target = $region21
    $region20: #{pallas_w8a8_linear.1} parent=1 // pred_region
      _
    $region21: #{pallas_w8a8_linear.1} parent=1 // pred_fallthru
      _
    // Predicated region
    $region22: #{pallas_w8a8_linear.1} parent=1 // pred_check
      _
    $region23: #{pallas_w8a8_linear.1} parent=1 // pred_check_branch
      %45 = sbr.rel (0) target = $region25
    $region24: #{pallas_w8a8_linear.1} parent=1 // pred_region
      %46 = dma.done [#allocation4], 512
    $region25: #{pallas_w8a8_linear.1} parent=1 // pred_fallthru
      _
    // Predicated region
    $region26: #{pallas_w8a8_linear.1} parent=1 // pred_check
      _
    $region27: #{pallas_w8a8_linear.1} parent=1 // pred_check_branch
      %48 = sbr.rel (0) target = $region29
    $region28: #{pallas_w8a8_linear.1} parent=1 // pred_region
      %49 = dma.done [#allocation7], 1024
    $region29: #{pallas_w8a8_linear.1} parent=1 // pred_fallthru
      _
    %p51 = scmp.eq.s32.totalorder 0, 0
    // Predicated region
    $region30: #{pallas_w8a8_linear.1} parent=1 // pred_check
      %p52 = pneg %p51
    $region31: #{pallas_w8a8_linear.1} parent=1 // pred_check_branch
      %54 = sbr.rel (%p52) target = $region33
    $region32: #{pallas_w8a8_linear.1} parent=1 // pred_region
      %55 = vst [vmem:[#allocation8] sm:$0xff] 0.0
      %56 = vst [vmem:[#allocation8 + $0x8] sm:$0xff] 0.0
    $region33: #{pallas_w8a8_linear.1} parent=1 // pred_fallthru
      _
    %s57 = sld [smem:[#allocation2]]
    %v58 = vld [vmem:[#allocation3] sm:$0xff]
    %v59 = vld [vmem:[#allocation3 + $0x8] sm:$0xff]
    %v60 = vld [vmem:[#allocation3 + $0x10] sm:$0xff]
    %v61 = vld [vmem:[#allocation3 + $0x18] sm:$0xff]
    %v62 = vstv %s57
    %v63 = vmul.f32 %v58, %v62
    %v64 = vmul.f32 %v59, %v62
    %v65 = vmul.f32 %v60, %v62
    %v66 = vmul.f32 %v61, %v62
    %v67 = vround.ne.pseudo %v63
    %v68 = vround.ne.pseudo %v64
    %v69 = vround.ne.pseudo %v65
    %v70 = vround.ne.pseudo %v66
    %v71 = vmax.f32 %v67, -128.0
    %v72 = vmax.f32 %v68, -128.0
    %v73 = vmax.f32 %v69, -128.0
    %v74 = vmax.f32 %v70, -128.0
    %v75 = vmin.f32 %v71, 127.0
    %v76 = vmin.f32 %v72, 127.0
    %v77 = vmin.f32 %v73, 127.0
    %v78 = vmin.f32 %v74, 127.0
    %v79 = vld [vmem:[#allocation8] sm:$0xff]
    %v80 = vld [vmem:[#allocation8 + $0x8] sm:$0xff]
    %v81 = vpack.c.bf16 %v77, %v75
    %v82 = vpack.c.bf16 %v78, %v76
    %v83 = vld [vmem:[#allocation6] sm:$0xff]
    %v84 = vld [vmem:[#allocation6 + $0x8] sm:$0xff]
    %v85 = vld [vmem:[#allocation6 + $0x10] sm:$0xff]
    %v86 = vld [vmem:[#allocation6 + $0x18] sm:$0xff]
    %v87 = vld [vmem:[#allocation6 + $0x20] sm:$0xff]
    %v88 = vld [vmem:[#allocation6 + $0x28] sm:$0xff]
    %v89 = vld [vmem:[#allocation6 + $0x30] sm:$0xff]
    %v90 = vld [vmem:[#allocation6 + $0x38] sm:$0xff]
    %v91 = vunpack.c.l.s8.bf16 %v83
    %v92 = vunpack.c.h.s8.bf16 %v83
    %v93 = vunpack.c.l.s8.bf16 %v84
    %v94 = vunpack.c.h.s8.bf16 %v84
    %v95 = vunpack.c.l.s8.bf16 %v85
    %v96 = vunpack.c.h.s8.bf16 %v85
    %v97 = vunpack.c.l.s8.bf16 %v86
    %v98 = vunpack.c.h.s8.bf16 %v86
    %v99 = vunpack.c.l.s8.bf16 %v87
    %v100 = vunpack.c.h.s8.bf16 %v87
    %v101 = vunpack.c.l.s8.bf16 %v88
    %v102 = vunpack.c.h.s8.bf16 %v88
    %v103 = vunpack.c.l.s8.bf16 %v89
    %v104 = vunpack.c.h.s8.bf16 %v89
    %v105 = vunpack.c.l.s8.bf16 %v90
    %v106 = vunpack.c.h.s8.bf16 %v90
    %107 = vmatprep.subr.bf16.mxu0 0
    %108 = vmatpush1.bf16.msra.mxu0 %v98
    %109 = vmatprep.subr.bf16.mxu0 0
    %110 = vmatpush1.bf16.msra.mxu0 %v97
    %111 = vmatprep.subr.bf16.mxu0 0
    %112 = vmatpush1.bf16.msra.mxu0 %v96
    %113 = vmatprep.subr.bf16.mxu0 0
    %114 = vmatpush1.bf16.msra.mxu0 %v95
    %115 = vmatprep.subr.bf16.mxu0 0
    %116 = vmatpush1.bf16.msra.mxu0 %v94
    %117 = vmatprep.subr.bf16.mxu0 0
    %118 = vmatpush1.bf16.msra.mxu0 %v93
    %119 = vmatprep.subr.bf16.mxu0 0
    %120 = vmatpush1.bf16.msra.mxu0 %v92
    %121 = vmatprep.subr.bf16.mxu0 0
    %122 = vmatpush1.bf16.msra.mxu0 %v91
    %123 = vmatprep.subr.bf16.mxu0 0
    %124 = vmatpush2.bf16.msra.mxu0 %v106
    %125 = vmatprep.subr.bf16.mxu0 0
    %126 = vmatpush2.bf16.msra.mxu0 %v105
    %127 = vmatprep.subr.bf16.mxu0 0
    %128 = vmatpush2.bf16.msra.mxu0 %v104
    %129 = vmatprep.subr.bf16.mxu0 0
    %130 = vmatpush2.bf16.msra.mxu0 %v103
    %131 = vmatprep.subr.bf16.mxu0 0
    %132 = vmatpush2.bf16.msra.mxu0 %v102
    %133 = vmatprep.subr.bf16.mxu0 0
    %134 = vmatpush2.bf16.msra.mxu0 %v101
    %135 = vmatprep.subr.bf16.mxu0 0
    %136 = vmatpush2.bf16.msra.mxu0 %v100
    %137 = vmatprep.subr.bf16.mxu0 0
    %138 = vmatpush2.bf16.msra.mxu0 %v99
    %139 = vmatprep.mubr.bf16.mxu0 %v82
    %140 = vmatmul.mubr.bf16.gmra.mxu0 %v81
    %v141 = vpop.f32.mrf.mxu0
    %v142 = vadd.f32 0.0, %v141
    %v143 = vpop.f32.mrf.mxu0
    %v144 = vpop.f32.mrf.mxu0
    %v145 = vadd.f32 0.0, %v144
    %v146 = vpop.f32.mrf.mxu0
    %147 = vdwg.mxu0
    %v148 = vadd.f32 %v79, %v142
    %v149 = vadd.f32 %v80, %v145
    %150 = vst [vmem:[#allocation8] sm:$0xff] %v148
    %151 = vst [vmem:[#allocation8 + $0x8] sm:$0xff] %v149
    // Predicated region
    $region34: #{pallas_w8a8_linear.1} parent=1 // pred_check
      %p152 = pneg %p51
    $region35: #{pallas_w8a8_linear.1} parent=1 // pred_check_branch
      %154 = sbr.rel (%p152) target = $region37
    $region36: #{pallas_w8a8_linear.1} parent=1 // pred_region
      %v155 = vld [vmem:[#allocation8] sm:$0xff]
      %v156 = vld [vmem:[#allocation8 + $0x8] sm:$0xff]
      %v157 = vld [vmem:[%s3] sm:$0x1]
      %v159 = vlaneseq
      %v160 = vshrl.u32 %v159, 7
      %v161 = vsub.s32 0, %v160
      %v162 = vrot.slane %v157, %v161
      %v164 = vadd.f32 %v155, %v162
      %v165 = vadd.f32 %v156, %v162
      %v166 = vld [vmem:[%s4] sm:$0x1]
      %v168 = vlaneseq
      %v169 = vshrl.u32 %v168, 7
      %v170 = vsub.s32 0, %v169
      %v171 = vrot.slane %v166, %v170
      %v173 = vmul.f32 %v164, %v171
      %v174 = vmul.f32 %v165, %v171
      %175 = vst [vmem:[#allocation8] sm:$0xff] %v173
      %176 = vst [vmem:[#allocation8 + $0x8] sm:$0xff] %v174
    $region37: #{pallas_w8a8_linear.1} parent=1 // pred_fallthru
      _
    // Predicated region
    $region38: #{pallas_w8a8_linear.1} parent=1 // pred_check
      _
    $region39: #{pallas_w8a8_linear.1} parent=1 // pred_check_branch
      %178 = sbr.rel (0) target = $region41
    $region40: #{pallas_w8a8_linear.1} parent=1 // pred_region
      %s180 = ssub.s32 256, 256
      %181 = vsyncadd [#allocation5], %s180
      %s182 = sshll.u32 [#allocation8], 4
      %s183 = int_to_ptr.vmem [resolvable:$true] %s182
      %188 = dma.vmem_to_hbm [thread:$0]  %s183, 256, %s5, [#allocation5], 128, 128, 8
    $region41: #{pallas_w8a8_linear.1} parent=1 // pred_fallthru
      _
    // Predicated region
    $region42: #{pallas_w8a8_linear.1} parent=1 // pred_check
      _
    $region43: #{pallas_w8a8_linear.1} parent=1 // pred_check_branch
      %190 = sbr.rel (0) target = $region45
    $region44: #{pallas_w8a8_linear.1} parent=1 // pred_region
      %191 = dma.done [#allocation5], 256
    $region45: #{pallas_w8a8_linear.1} parent=1 // pred_fallthru
      _
    %192 = vsyncpa [#allocation4], 1
    %193 = vsyncpa [#allocation7], 1
    %194 = vsyncpa [#allocation5], 1

</llo_original>
